<compile_context>
chip_gen: v7x
topology: tpu7x:2x2x1
jax: 0.10.0
libtpu: 0.0.40
codegen_flags: <defaults>
</compile_context>

<pallas_src>
import functools

import jax
import jax.numpy as jnp
import numpy as np
from jax.experimental import pallas as pl
from jax.experimental.pallas import tpu as pltpu


def _round_up(x, m):
    return -(-x // m) * m


# -----------------------------------------------------------------------------
# On-chip im2col + single MXU matmul for one output depth plane.
# -----------------------------------------------------------------------------
def _conv_plane(x0_ref, x1_ref, x2_ref, w_ref, xpad_ref, *, inc, c_pad, Wp, Qp):
    # Zero the channel-padded staging scratch, then drop the three halo planes
    # into rows [0, inc).  Pad rows must be zero: their weight columns are zero,
    # but stale VMEM bits could decode to NaN/Inf and 0 * NaN = NaN.
    xpad_ref[...] = jnp.zeros_like(xpad_ref)
    xpad_ref[0, 0:inc, :] = x0_ref[0, 0]
    xpad_ref[1, 0:inc, :] = x1_ref[0, 0]
    xpad_ref[2, 0:inc, :] = x2_ref[0, 0]

    # Column tile: tap (kd, kh, kw) of output position q = h*Wp + w is the
    # padded-plane element q + kh*Wp + kw of halo plane kd, i.e. a static
    # lane-offset slice.  Pieces are c_pad (multiple of 16) sublanes, so the
    # sublane concatenation is tile-aligned.
    pieces = []
    for kd in range(3):
        for kh in range(3):
            for kw in range(3):
                off = kh * Wp + kw
                pieces.append(xpad_ref[kd, :, off:off + Qp])     # (c_pad, Qp)
    cols = jnp.concatenate(pieces, axis=0)                        # (27*c_pad, Qp)

    # Single bf16 MXU matmul with f32 accumulation.
    return jnp.dot(w_ref[...], cols, preferred_element_type=jnp.float32)


# -----------------------------------------------------------------------------
# Pass 1: per-channel sum / sum-of-squares of the conv output (bias excluded;
# it is folded analytically into the affine later).
# -----------------------------------------------------------------------------
def _stats_kernel(x0_ref, x1_ref, x2_ref, w_ref, mask_ref, s_ref, xpad_ref,
                  *, inc, c_pad, Wp, Qp):
    y = _conv_plane(x0_ref, x1_ref, x2_ref, w_ref, xpad_ref,
                    inc=inc, c_pad=c_pad, Wp=Wp, Qp=Qp)           # (C, Qp) f32
    ym = y * mask_ref[...]                      # zero the lane-padding junk
    s1 = jnp.sum(ym, axis=1, keepdims=True)     # (C, 1)
    s2 = jnp.sum(ym * ym, axis=1, keepdims=True)

    @pl.when(pl.program_id(1) == 0)
    def _():
        s_ref[...] = jnp.zeros_like(s_ref)

    s_ref[0, :, 0:1] += s1
    s_ref[0, :, 1:2] += s2


# -----------------------------------------------------------------------------
# Pass 2: conv (recomputed, cheap while mem-bound) + fused GroupNorm affine
# (conv bias folded in) + SiLU, lane-dense bf16 stores.
# -----------------------------------------------------------------------------
def _apply_kernel(x0_ref, x1_ref, x2_ref, w_ref, p_ref, o_ref, xpad_ref,
                  *, inc, c_pad, Wp, Qp):
    y = _conv_plane(x0_ref, x1_ref, x2_ref, w_ref, xpad_ref,
                    inc=inc, c_pad=c_pad, Wp=Wp, Qp=Qp)           # (C, Qp) f32
    scale = p_ref[0, :, 0:1]                    # gamma * rstd              (C, 1)
    shift = p_ref[0, :, 1:2]                    # beta + (bias - mean)*scale
    z = y * scale + shift
    o_ref[0] = (z * jax.nn.sigmoid(z)).astype(o_ref.dtype)


# -----------------------------------------------------------------------------
# Wrapper.
# -----------------------------------------------------------------------------
def basic_convolution_block(x, weight, bias, gamma, beta, *, groups=32,
                            eps=1e-5, out_dtype=jnp.bfloat16):
    """x: (N, inc, D, H, W), weight: (outc, inc, 3, 3, 3) -> (N, outc, D, H, W)."""
    # TODO(synk): only the module defaults (ks=3, stride=1, dilation=1,
    # padding=1) are implemented; other configs need a generalized halo/tap
    # construction.
    N, inc, D, H, W = x.shape
    outc, inc_w, k0, k1, k2 = weight.shape
    assert (inc_w, k0, k1, k2) == (inc, 3, 3, 3)
    assert outc % groups == 0, "GroupNorm(32, outc) requires outc % 32 == 0"

    Dp, Hp, Wp = D + 2, H + 2, W + 2
    Qp = _round_up(H * Wp, 128)                 # lane-dense per-plane tile
    P = _round_up(Qp + 2 * Wp + 2, 128)         # plane slab (all tap slices in-bounds)
    c_pad = _round_up(inc, 16)                  # bf16 sublane tile -> aligned concat
    Kp = 27 * c_pad                             # contraction dim (multiple of 16)

    # ---- input: bf16 cast first, zero-pad once, flatten planes, lane-pad. ----
    xp = jnp.pad(x.astype(jnp.bfloat16),
                 ((0, 0), (0, 0), (1, 1), (1, 1), (1, 1)))        # (N, inc, Dp, Hp, Wp)
    xp = xp.reshape(N, inc, Dp, Hp * Wp).transpose(0, 2, 1, 3)    # (N, Dp, inc, Hp*Wp)
    xp = jnp.pad(xp, ((0, 0), (0, 0), (0, 0), (0, P - Hp * Wp)))  # (N, Dp, inc, P)

    # ---- weight: (outc, inc, 3,3,3) -> tap-major (kd, kh, kw, c_pad) rows. ----
    w_mat = jnp.pad(weight.transpose(0, 2, 3, 4, 1),
                    ((0, 0), (0, 0), (0, 0), (0, 0), (0, c_pad - inc)))
    w_mat = w_mat.reshape(outc, Kp).astype(jnp.bfloat16)

    # ---- lane-validity mask for the inflated per-plane tile. ----
    q = np.arange(Qp)
    mask = jnp.asarray(((q < H * Wp) & ((q % Wp) < W))
                       .astype(np.float32)[None, :])              # (1, Qp)

    # ---- specs shared by both passes (three halo depth-planes of the slab). --
    x_specs = [pl.BlockSpec((1, 1, inc, P), lambda n, d, kd=kd: (n, d + kd, 0, 0))
               for kd in range(3)]
    w_spec = pl.BlockSpec((outc, Kp), lambda n, d: (0, 0))
    scratch_shapes = [pltpu.VMEM((3, c_pad, P), jnp.bfloat16)]

    out_bytes = jnp.dtype(out_dtype).itemsize
    step_bytes = (2 * 3 * inc * P * 2            # halo planes (double-buffered)
                  + 2 * outc * Qp * out_bytes    # output tile (double-buffered)
                  + outc * Kp * 2                # weights
                  + 3 * c_pad * P * 2            # staging scratch
                  + Kp * Qp * 2                  # on-chip column tile
                  + 2 * outc * Qp * 4)           # f32 conv / SiLU temporaries
    vmem_limit = int(min(48 * 2 ** 20, max(16 * 2 ** 20, 2 * step_bytes)))

    kparams = dict(inc=inc, c_pad=c_pad, Wp=Wp, Qp=Qp)

    # ---------------- pass 1: masked per-channel sum / sum-of-squares. --------
    stats = pl.pallas_call(
        functools.partial(_stats_kernel, **kparams),
        out_shape=jax.ShapeDtypeStruct((N, outc, 2), jnp.float32),
        grid_spec=pltpu.PrefetchScalarGridSpec(
            num_scalar_prefetch=0, grid=(N, D),
            in_specs=[*x_specs, w_spec,
                      pl.BlockSpec((1, Qp), lambda n, d: (0, 0))],
            out_specs=pl.BlockSpec((1, outc, 2), lambda n, d: (n, 0, 0)),
            scratch_shapes=scratch_shapes),
        compiler_params=pltpu.CompilerParams(
            dimension_semantics=("parallel", "arbitrary"),
            vmem_limit_bytes=vmem_limit),
    )(xp, xp, xp, w_mat, mask)

    # ---------------- finalize GroupNorm affine in plain JAX (tiny). ----------
    s1, s2 = stats[..., 0], stats[..., 1]                          # (N, C)
    cnt = float(D * H * W)                                         # valid voxels/channel
    b = bias.astype(jnp.float32)[None, :]
    s1b = s1 + cnt * b                                             # fold conv bias
    s2b = s2 + 2.0 * b * s1 + cnt * b * b
    cpg = outc // groups
    gs1 = s1b.reshape(N, groups, cpg).sum(-1)
    gs2 = s2b.reshape(N, groups, cpg).sum(-1)
    n_grp = cnt * cpg
    gmean = gs1 / n_grp
    gvar = jnp.maximum(gs2 / n_grp - gmean * gmean, 0.0)           # clamp cancellation
    grstd = jax.lax.rsqrt(gvar + eps)
    mean_c = jnp.repeat(gmean, cpg, axis=1)                        # (N, C)
    rstd_c = jnp.repeat(grstd, cpg, axis=1)
    scale = gamma.astype(jnp.float32)[None, :] * rstd_c
    shift = beta.astype(jnp.float32)[None, :] + (b - mean_c) * scale
    params = jnp.stack([scale, shift], axis=-1)                    # (N, C, 2) f32

    # ---------------- pass 2: conv (recomputed) + normalize + SiLU. -----------
    out = pl.pallas_call(
        functools.partial(_apply_kernel, **kparams),
        out_shape=jax.ShapeDtypeStruct((N, outc, D * Qp), out_dtype),
        grid_spec=pltpu.PrefetchScalarGridSpec(
            num_scalar_prefetch=0, grid=(N, D),
            in_specs=[*x_specs, w_spec,
                      pl.BlockSpec((1, outc, 2), lambda n, d: (n, 0, 0))],
            out_specs=pl.BlockSpec((1, outc, Qp), lambda n, d: (n, 0, d)),
            scratch_shapes=scratch_shapes),
        compiler_params=pltpu.CompilerParams(
            dimension_semantics=("parallel", "parallel"),
            vmem_limit_bytes=vmem_limit),
    )(xp, xp, xp, w_mat, params)

    # Drop the lane padding: output is already channel-major, no transpose.
    out = out.reshape(N, outc, D, Qp)[..., :H * Wp]
    out = out.reshape(N, outc, D, H, Wp)[..., :W]
    return out


# -----------------------------------------------------------------------------
# Pure-JAX reference matching PyTorch semantics (sanity check).
# -----------------------------------------------------------------------------
def _reference(x, weight, bias, gamma, beta, groups=32, eps=1e-5):
    y = jax.lax.conv_general_dilated(
        x, weight, window_strides=(1, 1, 1),
        padding=((1, 1), (1, 1), (1, 1)),
        dimension_numbers=("NCDHW", "OIDHW", "NCDHW"))
    y = y + bias.reshape(1, -1, 1, 1, 1)
    N, C, D, H, W = y.shape
    yg = y.reshape(N, groups, C // groups, D, H, W)
    mean = yg.mean(axis=(2, 3, 4, 5), keepdims=True)
    var = ((yg - mean) ** 2).mean(axis=(2, 3, 4, 5), keepdims=True)
    yg = (yg - mean) * jax.lax.rsqrt(var + eps)
    y = yg.reshape(N, C, D, H, W)
    y = y * gamma.reshape(1, -1, 1, 1, 1) + beta.reshape(1, -1, 1, 1, 1)
    return y * jax.nn.sigmoid(y)


if __name__ == "__main__":
    # Module config: inc=4, outc=32 (GroupNorm(32, outc) requires outc % 32 == 0)
    N, inc, outc = 2, 4, 32
    D = H = W = 8
    ks = 3

    key = jax.random.PRNGKey(0)
    kx, kw_, kb, kg, kbeta = jax.random.split(key, 5)

    x = jax.random.normal(kx, (N, inc, D, H, W), dtype=jnp.float32)
    fan_in = inc * ks * ks * ks
    bound = float(1.0 / np.sqrt(fan_in))
    weight = jax.random.uniform(kw_, (outc, inc, ks, ks, ks),
                                minval=-bound, maxval=bound, dtype=jnp.float32)
    bias = jax.random.uniform(kb, (outc,), minval=-bound, maxval=bound,
                              dtype=jnp.float32)
    gamma = jnp.ones((outc,), jnp.float32) + 0.05 * jax.random.normal(kg, (outc,))
    beta = 0.05 * jax.random.normal(kbeta, (outc,))

    out = jax.block_until_ready(basic_convolution_block(x, weight, bias, gamma, beta))
    ref = jax.block_until_ready(_reference(x, weight, bias, gamma, beta))

    assert out.shape == (N, outc, D, H, W)
    assert out.dtype == jnp.bfloat16
    err = float(jnp.max(jnp.abs(out.astype(jnp.float32) - ref)))
    # bf16 MXU inputs + bf16 output -> slightly looser tolerance than pure-f32.
    assert jnp.allclose(out.astype(jnp.float32), ref, atol=3e-2, rtol=3e-2), (
        "max abs err %.4g" % err)
    print("KERNEL_OK")
</pallas_src>

<mosaic_0001>
module attributes {stable_mosaic.version = 11 : i64} {
  func.func @_stats_kernel(%arg0: i32, %arg1: i32, %arg2: memref<1x1x4x256xbf16, #tpu.memory_space<vmem>>, %arg3: memref<1x1x4x256xbf16, #tpu.memory_space<vmem>>, %arg4: memref<1x1x4x256xbf16, #tpu.memory_space<vmem>>, %arg5: memref<32x432xbf16, #tpu.memory_space<vmem>>, %arg6: memref<1x128xf32, #tpu.memory_space<vmem>>, %arg7: memref<1x32x2xf32, #tpu.memory_space<vmem>>, %arg8: memref<3x16x256xbf16, #tpu.memory_space<vmem>>) attributes {dimension_semantics = [#tpu.dimension_semantics<parallel>, #tpu.dimension_semantics<arbitrary>], iteration_bounds = array<i64: 2, 8>, scalar_prefetch = 0 : i64, scratch_operands = 1 : i64, tpu.core_type = #tpu.core_type<tc>, window_params = [{transform_indices = @transform_0, window_bounds = array<i64: 1, 1, 4, 256>}, {transform_indices = @transform_1, window_bounds = array<i64: 1, 1, 4, 256>}, {transform_indices = @transform_2, window_bounds = array<i64: 1, 1, 4, 256>}, {pipeline_mode = #tpu.pipeline_mode<synchronous>, transform_indices = @transform_3, window_bounds = array<i64: 32, 432>}, {pipeline_mode = #tpu.pipeline_mode<synchronous>, transform_indices = @transform_4, window_bounds = array<i64: 1, 128>}, {transform_indices = @transform_5, window_bounds = array<i64: 1, 32, 2>}]} {
    %cst = arith.constant 0.000000e+00 : bf16
    %0 = vector.broadcast %cst : bf16 to vector<3x16x256xbf16>
    %c0 = arith.constant 0 : index
    %c0_0 = arith.constant 0 : index
    %c0_1 = arith.constant 0 : index
    %1 = vector.load %arg8[%c0, %c0_0, %c0_1] : memref<3x16x256xbf16, #tpu.memory_space<vmem>>, vector<3x16x256xbf16>
    tpu.vector_store %arg8[%c0, %c0_0, %c0_1], %0 {strides = array<i32>} : memref<3x16x256xbf16, #tpu.memory_space<vmem>>, vector<3x16x256xbf16>,
    %c0_2 = arith.constant 0 : index
    %c0_3 = arith.constant 0 : index
    %c0_4 = arith.constant 0 : index
    %c0_5 = arith.constant 0 : index
    %2 = vector.load %arg2[%c0_2, %c0_3, %c0_4, %c0_5] : memref<1x1x4x256xbf16, #tpu.memory_space<vmem>>, vector<1x1x4x256xbf16>
    %3 = vector.shape_cast %2 : vector<1x1x4x256xbf16> to vector<4x256xbf16>
    %c0_6 = arith.constant 0 : index
    %c0_7 = arith.constant 0 : index
    %c0_8 = arith.constant 0 : index
    %4 = vector.load %arg8[%c0_6, %c0_7, %c0_8] : memref<3x16x256xbf16, #tpu.memory_space<vmem>>, vector<1x4x256xbf16>
    %5 = vector.shape_cast %4 : vector<1x4x256xbf16> to vector<4x256xbf16>
    %6 = vector.shape_cast %3 : vector<4x256xbf16> to vector<1x4x256xbf16>
    tpu.vector_store %arg8[%c0_6, %c0_7, %c0_8], %6 {strides = array<i32>} : memref<3x16x256xbf16, #tpu.memory_space<vmem>>, vector<1x4x256xbf16>,
    %c0_9 = arith.constant 0 : index
    %c0_10 = arith.constant 0 : index
    %c0_11 = arith.constant 0 : index
    %c0_12 = arith.constant 0 : index
    %7 = vector.load %arg3[%c0_9, %c0_10, %c0_11, %c0_12] : memref<1x1x4x256xbf16, #tpu.memory_space<vmem>>, vector<1x1x4x256xbf16>
    %8 = vector.shape_cast %7 : vector<1x1x4x256xbf16> to vector<4x256xbf16>
    %c1 = arith.constant 1 : index
    %c0_13 = arith.constant 0 : index
    %c0_14 = arith.constant 0 : index
    %9 = vector.load %arg8[%c1, %c0_13, %c0_14] : memref<3x16x256xbf16, #tpu.memory_space<vmem>>, vector<1x4x256xbf16>
    %10 = vector.shape_cast %9 : vector<1x4x256xbf16> to vector<4x256xbf16>
    %11 = vector.shape_cast %8 : vector<4x256xbf16> to vector<1x4x256xbf16>
    tpu.vector_store %arg8[%c1, %c0_13, %c0_14], %11 {strides = array<i32>} : memref<3x16x256xbf16, #tpu.memory_space<vmem>>, vector<1x4x256xbf16>,
    %c0_15 = arith.constant 0 : index
    %c0_16 = arith.constant 0 : index
    %c0_17 = arith.constant 0 : index
    %c0_18 = arith.constant 0 : index
    %12 = vector.load %arg4[%c0_15, %c0_16, %c0_17, %c0_18] : memref<1x1x4x256xbf16, #tpu.memory_space<vmem>>, vector<1x1x4x256xbf16>
    %13 = vector.shape_cast %12 : vector<1x1x4x256xbf16> to vector<4x256xbf16>
    %c2 = arith.constant 2 : index
    %c0_19 = arith.constant 0 : index
    %c0_20 = arith.constant 0 : index
    %14 = vector.load %arg8[%c2, %c0_19, %c0_20] : memref<3x16x256xbf16, #tpu.memory_space<vmem>>, vector<1x4x256xbf16>
    %15 = vector.shape_cast %14 : vector<1x4x256xbf16> to vector<4x256xbf16>
    %16 = vector.shape_cast %13 : vector<4x256xbf16> to vector<1x4x256xbf16>
    tpu.vector_store %arg8[%c2, %c0_19, %c0_20], %16 {strides = array<i32>} : memref<3x16x256xbf16, #tpu.memory_space<vmem>>, vector<1x4x256xbf16>,
    %c0_21 = arith.constant 0 : index
    %c0_22 = arith.constant 0 : index
    %c0_23 = arith.constant 0 : index
    %17 = vector.load %arg8[%c0_21, %c0_22, %c0_23] : memref<3x16x256xbf16, #tpu.memory_space<vmem>>, vector<1x16x128xbf16>
    %18 = vector.shape_cast %17 : vector<1x16x128xbf16> to vector<16x128xbf16>
    %c0_24 = arith.constant 0 : index
    %c0_25 = arith.constant 0 : index
    %c1_26 = arith.constant 1 : index
    %19 = vector.load %arg8[%c0_24, %c0_25, %c1_26] : memref<3x16x256xbf16, #tpu.memory_space<vmem>>, vector<1x16x128xbf16>
    %20 = vector.shape_cast %19 : vector<1x16x128xbf16> to vector<16x128xbf16>
    %c0_27 = arith.constant 0 : index
    %c0_28 = arith.constant 0 : index
    %c2_29 = arith.constant 2 : index
    %21 = vector.load %arg8[%c0_27, %c0_28, %c2_29] : memref<3x16x256xbf16, #tpu.memory_space<vmem>>, vector<1x16x128xbf16>
    %22 = vector.shape_cast %21 : vector<1x16x128xbf16> to vector<16x128xbf16>
    %c0_30 = arith.constant 0 : index
    %c0_31 = arith.constant 0 : index
    %c10 = arith.constant 10 : index
    %23 = vector.load %arg8[%c0_30, %c0_31, %c10] : memref<3x16x256xbf16, #tpu.memory_space<vmem>>, vector<1x16x128xbf16>
    %24 = vector.shape_cast %23 : vector<1x16x128xbf16> to vector<16x128xbf16>
    %c0_32 = arith.constant 0 : index
    %c0_33 = arith.constant 0 : index
    %c11 = arith.constant 11 : index
    %25 = vector.load %arg8[%c0_32, %c0_33, %c11] : memref<3x16x256xbf16, #tpu.memory_space<vmem>>, vector<1x16x128xbf16>
    %26 = vector.shape_cast %25 : vector<1x16x128xbf16> to vector<16x128xbf16>
    %c0_34 = arith.constant 0 : index
    %c0_35 = arith.constant 0 : index
    %c12 = arith.constant 12 : index
    %27 = vector.load %arg8[%c0_34, %c0_35, %c12] : memref<3x16x256xbf16, #tpu.memory_space<vmem>>, vector<1x16x128xbf16>
    %28 = vector.shape_cast %27 : vector<1x16x128xbf16> to vector<16x128xbf16>
    %c0_36 = arith.constant 0 : index
    %c0_37 = arith.constant 0 : index
    %c20 = arith.constant 20 : index
    %29 = vector.load %arg8[%c0_36, %c0_37, %c20] : memref<3x16x256xbf16, #tpu.memory_space<vmem>>, vector<1x16x128xbf16>
    %30 = vector.shape_cast %29 : vector<1x16x128xbf16> to vector<16x128xbf16>
    %c0_38 = arith.constant 0 : index
    %c0_39 = arith.constant 0 : index
    %c21 = arith.constant 21 : index
    %31 = vector.load %arg8[%c0_38, %c0_39, %c21] : memref<3x16x256xbf16, #tpu.memory_space<vmem>>, vector<1x16x128xbf16>
    %32 = vector.shape_cast %31 : vector<1x16x128xbf16> to vector<16x128xbf16>
    %c0_40 = arith.constant 0 : index
    %c0_41 = arith.constant 0 : index
    %c22 = arith.constant 22 : index
    %33 = vector.load %arg8[%c0_40, %c0_41, %c22] : memref<3x16x256xbf16, #tpu.memory_space<vmem>>, vector<1x16x128xbf16>
    %34 = vector.shape_cast %33 : vector<1x16x128xbf16> to vector<16x128xbf16>
    %c1_42 = arith.constant 1 : index
    %c0_43 = arith.constant 0 : index
    %c0_44 = arith.constant 0 : index
    %35 = vector.load %arg8[%c1_42, %c0_43, %c0_44] : memref<3x16x256xbf16, #tpu.memory_space<vmem>>, vector<1x16x128xbf16>
    %36 = vector.shape_cast %35 : vector<1x16x128xbf16> to vector<16x128xbf16>
    %c1_45 = arith.constant 1 : index
    %c0_46 = arith.constant 0 : index
    %c1_47 = arith.constant 1 : index
    %37 = vector.load %arg8[%c1_45, %c0_46, %c1_47] : memref<3x16x256xbf16, #tpu.memory_space<vmem>>, vector<1x16x128xbf16>
    %38 = vector.shape_cast %37 : vector<1x16x128xbf16> to vector<16x128xbf16>
    %c1_48 = arith.constant 1 : index
    %c0_49 = arith.constant 0 : index
    %c2_50 = arith.constant 2 : index
    %39 = vector.load %arg8[%c1_48, %c0_49, %c2_50] : memref<3x16x256xbf16, #tpu.memory_space<vmem>>, vector<1x16x128xbf16>
    %40 = vector.shape_cast %39 : vector<1x16x128xbf16> to vector<16x128xbf16>
    %c1_51 = arith.constant 1 : index
    %c0_52 = arith.constant 0 : index
    %c10_53 = arith.constant 10 : index
    %41 = vector.load %arg8[%c1_51, %c0_52, %c10_53] : memref<3x16x256xbf16, #tpu.memory_space<vmem>>, vector<1x16x128xbf16>
    %42 = vector.shape_cast %41 : vector<1x16x128xbf16> to vector<16x128xbf16>
    %c1_54 = arith.constant 1 : index
    %c0_55 = arith.constant 0 : index
    %c11_56 = arith.constant 11 : index
    %43 = vector.load %arg8[%c1_54, %c0_55, %c11_56] : memref<3x16x256xbf16, #tpu.memory_space<vmem>>, vector<1x16x128xbf16>
    %44 = vector.shape_cast %43 : vector<1x16x128xbf16> to vector<16x128xbf16>
    %c1_57 = arith.constant 1 : index
    %c0_58 = arith.constant 0 : index
    %c12_59 = arith.constant 12 : index
    %45 = vector.load %arg8[%c1_57, %c0_58, %c12_59] : memref<3x16x256xbf16, #tpu.memory_space<vmem>>, vector<1x16x128xbf16>
    %46 = vector.shape_cast %45 : vector<1x16x128xbf16> to vector<16x128xbf16>
    %c1_60 = arith.constant 1 : index
    %c0_61 = arith.constant 0 : index
    %c20_62 = arith.constant 20 : index
    %47 = vector.load %arg8[%c1_60, %c0_61, %c20_62] : memref<3x16x256xbf16, #tpu.memory_space<vmem>>, vector<1x16x128xbf16>
    %48 = vector.shape_cast %47 : vector<1x16x128xbf16> to vector<16x128xbf16>
    %c1_63 = arith.constant 1 : index
    %c0_64 = arith.constant 0 : index
    %c21_65 = arith.constant 21 : index
    %49 = vector.load %arg8[%c1_63, %c0_64, %c21_65] : memref<3x16x256xbf16, #tpu.memory_space<vmem>>, vector<1x16x128xbf16>
    %50 = vector.shape_cast %49 : vector<1x16x128xbf16> to vector<16x128xbf16>
    %c1_66 = arith.constant 1 : index
    %c0_67 = arith.constant 0 : index
    %c22_68 = arith.constant 22 : index
    %51 = vector.load %arg8[%c1_66, %c0_67, %c22_68] : memref<3x16x256xbf16, #tpu.memory_space<vmem>>, vector<1x16x128xbf16>
    %52 = vector.shape_cast %51 : vector<1x16x128xbf16> to vector<16x128xbf16>
    %c2_69 = arith.constant 2 : index
    %c0_70 = arith.constant 0 : index
    %c0_71 = arith.constant 0 : index
    %53 = vector.load %arg8[%c2_69, %c0_70, %c0_71] : memref<3x16x256xbf16, #tpu.memory_space<vmem>>, vector<1x16x128xbf16>
    %54 = vector.shape_cast %53 : vector<1x16x128xbf16> to vector<16x128xbf16>
    %c2_72 = arith.constant 2 : index
    %c0_73 = arith.constant 0 : index
    %c1_74 = arith.constant 1 : index
    %55 = vector.load %arg8[%c2_72, %c0_73, %c1_74] : memref<3x16x256xbf16, #tpu.memory_space<vmem>>, vector<1x16x128xbf16>
    %56 = vector.shape_cast %55 : vector<1x16x128xbf16> to vector<16x128xbf16>
    %c2_75 = arith.constant 2 : index
    %c0_76 = arith.constant 0 : index
    %c2_77 = arith.constant 2 : index
    %57 = vector.load %arg8[%c2_75, %c0_76, %c2_77] : memref<3x16x256xbf16, #tpu.memory_space<vmem>>, vector<1x16x128xbf16>
    %58 = vector.shape_cast %57 : vector<1x16x128xbf16> to vector<16x128xbf16>
    %c2_78 = arith.constant 2 : index
    %c0_79 = arith.constant 0 : index
    %c10_80 = arith.constant 10 : index
    %59 = vector.load %arg8[%c2_78, %c0_79, %c10_80] : memref<3x16x256xbf16, #tpu.memory_space<vmem>>, vector<1x16x128xbf16>
    %60 = vector.shape_cast %59 : vector<1x16x128xbf16> to vector<16x128xbf16>
    %c2_81 = arith.constant 2 : index
    %c0_82 = arith.constant 0 : index
    %c11_83 = arith.constant 11 : index
    %61 = vector.load %arg8[%c2_81, %c0_82, %c11_83] : memref<3x16x256xbf16, #tpu.memory_space<vmem>>, vector<1x16x128xbf16>
    %62 = vector.shape_cast %61 : vector<1x16x128xbf16> to vector<16x128xbf16>
    %c2_84 = arith.constant 2 : index
    %c0_85 = arith.constant 0 : index
    %c12_86 = arith.constant 12 : index
    %63 = vector.load %arg8[%c2_84, %c0_85, %c12_86] : memref<3x16x256xbf16, #tpu.memory_space<vmem>>, vector<1x16x128xbf16>
    %64 = vector.shape_cast %63 : vector<1x16x128xbf16> to vector<16x128xbf16>
    %c2_87 = arith.constant 2 : index
    %c0_88 = arith.constant 0 : index
    %c20_89 = arith.constant 20 : index
    %65 = vector.load %arg8[%c2_87, %c0_88, %c20_89] : memref<3x16x256xbf16, #tpu.memory_space<vmem>>, vector<1x16x128xbf16>
    %66 = vector.shape_cast %65 : vector<1x16x128xbf16> to vector<16x128xbf16>
    %c2_90 = arith.constant 2 : index
    %c0_91 = arith.constant 0 : index
    %c21_92 = arith.constant 21 : index
    %67 = vector.load %arg8[%c2_90, %c0_91, %c21_92] : memref<3x16x256xbf16, #tpu.memory_space<vmem>>, vector<1x16x128xbf16>
    %68 = vector.shape_cast %67 : vector<1x16x128xbf16> to vector<16x128xbf16>
    %c2_93 = arith.constant 2 : index
    %c0_94 = arith.constant 0 : index
    %c22_95 = arith.constant 22 : index
    %69 = vector.load %arg8[%c2_93, %c0_94, %c22_95] : memref<3x16x256xbf16, #tpu.memory_space<vmem>>, vector<1x16x128xbf16>
    %70 = vector.shape_cast %69 : vector<1x16x128xbf16> to vector<16x128xbf16>
    %71 = tpu.concatenate %18, %20, %22, %24, %26, %28, %30, %32, %34, %36, %38, %40, %42, %44, %46, %48 in 0 : vector<16x128xbf16>, vector<16x128xbf16>, vector<16x128xbf16>, vector<16x128xbf16>, vector<16x128xbf16>, vector<16x128xbf16>, vector<16x128xbf16>, vector<16x128xbf16>, vector<16x128xbf16>, vector<16x128xbf16>, vector<16x128xbf16>, vector<16x128xbf16>, vector<16x128xbf16>, vector<16x128xbf16>, vector<16x128xbf16>, vector<16x128xbf16> -> vector<256x128xbf16>
    %72 = tpu.concatenate %50, %52, %54, %56, %58, %60, %62, %64, %66, %68, %70 in 0 : vector<16x128xbf16>, vector<16x128xbf16>, vector<16x128xbf16>, vector<16x128xbf16>, vector<16x128xbf16>, vector<16x128xbf16>, vector<16x128xbf16>, vector<16x128xbf16>, vector<16x128xbf16>, vector<16x128xbf16>, vector<16x128xbf16> -> vector<176x128xbf16>
    %73 = tpu.concatenate %71, %72 in 0 : vector<256x128xbf16>, vector<176x128xbf16> -> vector<432x128xbf16>
    %c0_96 = arith.constant 0 : index
    %c0_97 = arith.constant 0 : index
    %74 = vector.load %arg5[%c0_96, %c0_97] : memref<32x432xbf16, #tpu.memory_space<vmem>>, vector<32x432xbf16>
    %cst_98 = arith.constant dense<0.000000e+00> : vector<32x128xf32>
    %75 = tpu.matmul %74, %73, %cst_98 {dimension_numbers = #tpu.dot_dimension_numbers<[1], [0], [0], [1], [0, 0, 1, 1], [], []>} : vector<32x432xbf16>, vector<432x128xbf16>, vector<32x128xf32> -> vector<32x128xf32>
    %c0_99 = arith.constant 0 : index
    %c0_100 = arith.constant 0 : index
    %76 = vector.load %arg6[%c0_99, %c0_100] : memref<1x128xf32, #tpu.memory_space<vmem>>, vector<1x128xf32>
    %77 = vector.broadcast %76 : vector<1x128xf32> to vector<32x128xf32>
    %78 = arith.mulf %75, %77 : vector<32x128xf32>
    %cst_101 = arith.constant dense<0.000000e+00> : vector<32xf32>
    %79 = vector.multi_reduction <add>, %78, %cst_101 [1] : vector<32x128xf32> to vector<32xf32>
    %80 = vector.shape_cast %79 : vector<32xf32> to vector<32x1xf32>
    %81 = arith.mulf %78, %78 : vector<32x128xf32>
    %cst_102 = arith.constant dense<0.000000e+00> : vector<32xf32>
    %82 = vector.multi_reduction <add>, %81, %cst_102 [1] : vector<32x128xf32> to vector<32xf32>
    %83 = vector.shape_cast %82 : vector<32xf32> to vector<32x1xf32>
    %c0_i32 = arith.constant 0 : i32
    %84 = arith.cmpi eq, %arg1, %c0_i32 : i32
    %85 = arith.extui %84 : i1 to i32
    %c0_i32_103 = arith.constant 0 : i32
    %86 = arith.cmpi ne, %85, %c0_i32_103 : i32
    scf.if %86 {
      %cst_116 = arith.constant 0.000000e+00 : f32
      %99 = vector.broadcast %cst_116 : f32 to vector<1x32x2xf32>
      %c0_117 = arith.constant 0 : index
      %c0_118 = arith.constant 0 : index
      %c0_119 = arith.constant 0 : index
      %100 = vector.load %arg7[%c0_117, %c0_118, %c0_119] : memref<1x32x2xf32, #tpu.memory_space<vmem>>, vector<1x32x2xf32>
      tpu.vector_store %arg7[%c0_117, %c0_118, %c0_119], %99 {strides = array<i32>} : memref<1x32x2xf32, #tpu.memory_space<vmem>>, vector<1x32x2xf32>,
    } else {
    }
    %c0_104 = arith.constant 0 : index
    %c0_105 = arith.constant 0 : index
    %c0_106 = arith.constant 0 : index
    %87 = vector.load %arg7[%c0_104, %c0_105, %c0_106] : memref<1x32x2xf32, #tpu.memory_space<vmem>>, vector<1x32x1xf32>
    %88 = vector.shape_cast %87 : vector<1x32x1xf32> to vector<32x1xf32>
    %89 = arith.addf %88, %80 : vector<32x1xf32>
    %c0_107 = arith.constant 0 : index
    %c0_108 = arith.constant 0 : index
    %c0_109 = arith.constant 0 : index
    %90 = vector.load %arg7[%c0_107, %c0_108, %c0_109] : memref<1x32x2xf32, #tpu.memory_space<vmem>>, vector<1x32x1xf32>
    %91 = vector.shape_cast %90 : vector<1x32x1xf32> to vector<32x1xf32>
    %92 = vector.shape_cast %89 : vector<32x1xf32> to vector<1x32x1xf32>
    tpu.vector_store %arg7[%c0_107, %c0_108, %c0_109], %92 {strides = array<i32>} : memref<1x32x2xf32, #tpu.memory_space<vmem>>, vector<1x32x1xf32>,
    %c0_110 = arith.constant 0 : index
    %c0_111 = arith.constant 0 : index
    %c1_112 = arith.constant 1 : index
    %93 = vector.load %arg7[%c0_110, %c0_111, %c1_112] : memref<1x32x2xf32, #tpu.memory_space<vmem>>, vector<1x32x1xf32>
    %94 = vector.shape_cast %93 : vector<1x32x1xf32> to vector<32x1xf32>
    %95 = arith.addf %94, %83 : vector<32x1xf32>
    %c0_113 = arith.constant 0 : index
    %c0_114 = arith.constant 0 : index
    %c1_115 = arith.constant 1 : index
    %96 = vector.load %arg7[%c0_113, %c0_114, %c1_115] : memref<1x32x2xf32, #tpu.memory_space<vmem>>, vector<1x32x1xf32>
    %97 = vector.shape_cast %96 : vector<1x32x1xf32> to vector<32x1xf32>
    %98 = vector.shape_cast %95 : vector<32x1xf32> to vector<1x32x1xf32>
    tpu.vector_store %arg7[%c0_113, %c0_114, %c1_115], %98 {strides = array<i32>} : memref<1x32x2xf32, #tpu.memory_space<vmem>>, vector<1x32x1xf32>,
    return
  }
  func.func @transform_0(%arg0: i32, %arg1: i32) -> (i32, i32, i32, i32) {
    %c0_i32 = arith.constant 0 : i32
    %0 = arith.addi %arg1, %c0_i32 : i32
    %c0_i32_0 = arith.constant 0 : i32
    %c0_i32_1 = arith.constant 0 : i32
    %c0_i32_2 = arith.constant 0 : i32
    return %arg0, %0, %c0_i32_0, %c0_i32_1 : i32, i32, i32, i32
  }
  func.func @transform_1(%arg0: i32, %arg1: i32) -> (i32, i32, i32, i32) {
    %c1_i32 = arith.constant 1 : i32
    %0 = arith.addi %arg1, %c1_i32 : i32
    %c0_i32 = arith.constant 0 : i32
    %c0_i32_0 = arith.constant 0 : i32
    %c0_i32_1 = arith.constant 0 : i32
    return %arg0, %0, %c0_i32, %c0_i32_0 : i32, i32, i32, i32
  }
  func.func @transform_2(%arg0: i32, %arg1: i32) -> (i32, i32, i32, i32) {
    %c2_i32 = arith.constant 2 : i32
    %0 = arith.addi %arg1, %c2_i32 : i32
    %c0_i32 = arith.constant 0 : i32
    %c0_i32_0 = arith.constant 0 : i32
    %c0_i32_1 = arith.constant 0 : i32
    return %arg0, %0, %c0_i32, %c0_i32_0 : i32, i32, i32, i32
  }
  func.func @transform_3(%arg0: i32, %arg1: i32) -> (i32, i32) {
    %c0_i32 = arith.constant 0 : i32
    %c0_i32_0 = arith.constant 0 : i32
    %c0_i32_1 = arith.constant 0 : i32
    return %c0_i32, %c0_i32_0 : i32, i32
  }
  func.func @transform_4(%arg0: i32, %arg1: i32) -> (i32, i32) {
    %c0_i32 = arith.constant 0 : i32
    %c0_i32_0 = arith.constant 0 : i32
    %c0_i32_1 = arith.constant 0 : i32
    return %c0_i32, %c0_i32_0 : i32, i32
  }
  func.func @transform_5(%arg0: i32, %arg1: i32) -> (i32, i32, i32) {
    %c0_i32 = arith.constant 0 : i32
    %c0_i32_0 = arith.constant 0 : i32
    %c0_i32_1 = arith.constant 0 : i32
    return %arg0, %c0_i32, %c0_i32_0 : i32, i32, i32
  }
}

</mosaic_0001>

<llo_original>
// kernel: tpu_custom_call.1
$region0: #{tpu_custom_call.1}
  #allocation0 [shape = 'u32[]', space=smem, size = 0x4, offset = 0x4, fixed_abs, tag = 'smem constant byte address 0x4 - core index']
  #allocation1 [shape = 'u32[144,128]{1,0:T(1,128)}', space=vmem, size = 0x12000, scoped, tag = 'internal scratch']
  #allocation2 [shape = 'bf16[3,16,256]{2,1,0:T(16,128)(2,1)}', space=vmem, size = 0x6000, scoped, tag = 'scratch operand']
  %s0 = inlined_call_operand.hbm [shape: bf16[2,10,4,256], index: 0, kind: input, shape index: {}]
  %s1 = inlined_call_operand.hbm [shape: bf16[2,10,4,256], index: 1, kind: input, shape index: {}]
  %s2 = inlined_call_operand.hbm [shape: bf16[2,10,4,256], index: 2, kind: input, shape index: {}]
  %s3 = inlined_call_operand.hbm [shape: bf16[32,432], index: 3, kind: input, shape index: {}]
  %s4 = inlined_call_operand.vmem [shape: f32[1,128], index: 4, kind: input, shape index: {}]
  %s5 = inlined_call_operand.vmem [shape: f32[2,32,2], index: 5, kind: output, shape index: {}]
  %s6 = sld [smem:[#allocation0]]
  $region73: #{tpu_custom_call.1} parent=0
    _
  %s8 = ssub.s32 1, %s6
  %s9 = scalar_select 0, %s8, %s6
  $region1: #{tpu_custom_call.1} parent=0
    #allocation3 [shape = 'u8[4096]{0}', space=vmem, size = 0x1000, scoped, tag = 'input window, operand 0']
    #allocation4 [shape = 's32[2]{0}', space=sflag, size = 0x8, scoped, tag = 'scoped memory for tpu_custom_call.1']
    #allocation5 [shape = 'u8[4096]{0}', space=vmem, size = 0x1000, scoped, tag = 'input window, operand 1']
    #allocation6 [shape = 's32[2]{0}', space=sflag, size = 0x8, scoped, tag = 'scoped memory for tpu_custom_call.1']
    #allocation7 [shape = 'u8[4096]{0}', space=vmem, size = 0x1000, scoped, tag = 'input window, operand 2']
    #allocation8 [shape = 'u8[32768]{0}', space=vmem, size = 0x8000, scoped, tag = 'input window, operand 3, single buffered']
    #allocation9 [shape = 's32[1]{0}', space=sflag, size = 0x4, scoped, tag = 'scoped memory for tpu_custom_call.1']
    %10 = vsyncpa [#allocation4], 0
    %s11 = scalar_lea.sflag [#allocation4], 1
    %12 = vsyncpa %s11, 0
    %13 = vsyncpa [#allocation6], 0
    %s14 = scalar_lea.sflag [#allocation6], 1
    %15 = vsyncpa %s14, 0
    %16 = vsyncpa [#allocation9], 0
    loop: start=0, step=1, limit=18
    $region2: #{tpu_custom_call.1} parent=1 // loop_pre_header
      _
    $region3: #{tpu_custom_call.1} parent=1 // loop_header
      %s18 = sphi 0, %s22
      %p19 = scmp.ge.s32.totalorder %s18, 18
      %s25 = sphi 0, %s37
      %s26 = sphi 0, %s33
      %s27 = sphi 0, %s25
      %s28 = sphi 0, %s26
      %s29 = sphi 0, %s27
      %s30 = sphi 0, %s28
      %s42 = sphi 0, %s44
      %s45 = sphi 0, %s42
      %s46 = sphi 0, %s45
      %s62 = sphi 0, %s46
      %s72 = sphi 0, %s74
      %s75 = sphi 0, %s72
      %s76 = sphi 0, %s75
      %s92 = sphi 0, %s76
      %s102 = sphi 0, %s104
      %s105 = sphi 0, %s102
      %s106 = sphi 0, %s105
      %s122 = sphi 0, %s106
      %s126 = sphi 0, %s126
      %s128 = sphi 0, %s126
      %s129 = sphi 0, %s128
      %s143 = sphi 0, %s129
      %s147 = sphi 0, %s147
      %s149 = sphi 0, %s147
      %s150 = sphi 0, %s149
      %s164 = sphi 0, %s150
      %s170 = sphi 0, %s172
      %s173 = sphi 0, %s170
      %s174 = sphi 0, %s173
      %s190 = sphi 0, %s174
    $region4: #{tpu_custom_call.1} parent=1 // loop_header_branch
      %21 = sbr.rel (%p19) target = $region8
    $region5: #{tpu_custom_call.1} parent=1 // loop_body
      %s23 = ssub.s32 %s18, 1
      %s24 = ssub.s32 %s18, 2
      %s31 = sadd.s32 1, %s26
      %p32 = scmp.ge.s32.totalorder %s31, 8
      %s33 = scalar_select %p32, 0, %s31
      %s34 = sadd.s32 1, %s25
      %s35 = scalar_select %p32, %s34, %s25
      %p36 = scmp.ge.s32.totalorder %s35, 2
      %s37 = scalar_select %p36, 0, %s35
      %s38 = ssub.s32 %s25, %s37
      %s39 = ssub.s32 %s26, %s33
      %s40 = sor.u32 %s38, %s39
      %p41 = scmp.eq.s32.totalorder %s40, 0
      %s43 = sadd.s32 %s42, 1
      %s44 = scalar_select %p41, %s42, %s43
      %p47 = pneg %p41
      %p48 = scmp.eq.s32.totalorder %s18, 15
      %p49 = por %p47, %p48
      %p50 = scmp.ne.s32.totalorder %s42, %s45
      %p51 = scmp.eq.s32.totalorder %s18, 0
      %p52 = por %p50, %p51
      %p53 = scmp.ne.s32.totalorder %s42, %s45
      %p54 = scmp.eq.s32.totalorder %s23, 15
      %p55 = por %p53, %p54
      %p56 = scmp.ne.s32.totalorder %s45, %s46
      %p57 = scmp.eq.s32.totalorder %s23, 0
      %p58 = por %p56, %p57
      %p59 = scmp.ne.s32.totalorder %s45, %s46
      %p60 = scmp.eq.s32.totalorder %s24, 15
      %p61 = por %p59, %p60
      %p63 = scmp.ne.s32.totalorder %s46, %s62
      %p64 = scmp.eq.s32.totalorder %s24, 0
      %p65 = por %p63, %p64
      %s66 = sadd.s32 %s26, 1
      %s67 = sadd.s32 %s33, 1
      %s68 = ssub.s32 %s25, %s37
      %s69 = ssub.s32 %s66, %s67
      %s70 = sor.u32 %s68, %s69
      %p71 = scmp.eq.s32.totalorder %s70, 0
      %s73 = sadd.s32 %s72, 1
      %s74 = scalar_select %p71, %s72, %s73
      %p77 = pneg %p71
      %p78 = scmp.eq.s32.totalorder %s18, 15
      %p79 = por %p77, %p78
      %p80 = scmp.ne.s32.totalorder %s72, %s75
      %p81 = scmp.eq.s32.totalorder %s18, 0
      %p82 = por %p80, %p81
      %p83 = scmp.ne.s32.totalorder %s72, %s75
      %p84 = scmp.eq.s32.totalorder %s23, 15
      %p85 = por %p83, %p84
      %p86 = scmp.ne.s32.totalorder %s75, %s76
      %p87 = scmp.eq.s32.totalorder %s23, 0
      %p88 = por %p86, %p87
      %p89 = scmp.ne.s32.totalorder %s75, %s76
      %p90 = scmp.eq.s32.totalorder %s24, 15
      %p91 = por %p89, %p90
      %p93 = scmp.ne.s32.totalorder %s76, %s92
      %p94 = scmp.eq.s32.totalorder %s24, 0
      %p95 = por %p93, %p94
      %s96 = sadd.s32 %s26, 2
      %s97 = sadd.s32 %s33, 2
      %s98 = ssub.s32 %s25, %s37
      %s99 = ssub.s32 %s96, %s97
      %s100 = sor.u32 %s98, %s99
      %p101 = scmp.eq.s32.totalorder %s100, 0
      %s103 = sadd.s32 %s102, 1
      %s104 = scalar_select %p101, %s102, %s103
      %p107 = pneg %p101
      %p108 = scmp.eq.s32.totalorder %s18, 15
      %p109 = por %p107, %p108
      %p110 = scmp.ne.s32.totalorder %s102, %s105
      %p111 = scmp.eq.s32.totalorder %s18, 0
      %p112 = por %p110, %p111
      %p113 = scmp.ne.s32.totalorder %s102, %s105
      %p114 = scmp.eq.s32.totalorder %s23, 15
      %p115 = por %p113, %p114
      %p116 = scmp.ne.s32.totalorder %s105, %s106
      %p117 = scmp.eq.s32.totalorder %s23, 0
      %p118 = por %p116, %p117
      %p119 = scmp.ne.s32.totalorder %s105, %s106
      %p120 = scmp.eq.s32.totalorder %s24, 15
      %p121 = por %p119, %p120
      %p123 = scmp.ne.s32.totalorder %s106, %s122
      %p124 = scmp.eq.s32.totalorder %s24, 0
      %p125 = por %p123, %p124
      %s127 = sadd.s32 %s126, 1
      %p130 = scmp.eq.s32.totalorder %s18, 15
      %p131 = scmp.ne.s32.totalorder %s126, %s128
      %p132 = scmp.eq.s32.totalorder %s18, 0
      %p133 = por %p131, %p132
      %p134 = scmp.ne.s32.totalorder %s126, %s128
      %p135 = scmp.eq.s32.totalorder %s23, 15
      %p136 = por %p134, %p135
      %p137 = scmp.ne.s32.totalorder %s128, %s129
      %p138 = scmp.eq.s32.totalorder %s23, 0
      %p139 = por %p137, %p138
      %p140 = scmp.ne.s32.totalorder %s128, %s129
      %p141 = scmp.eq.s32.totalorder %s24, 15
      %p142 = por %p140, %p141
      %p144 = scmp.ne.s32.totalorder %s129, %s143
      %p145 = scmp.eq.s32.totalorder %s24, 0
      %p146 = por %p144, %p145
      %s148 = sadd.s32 %s147, 1
      %p151 = scmp.eq.s32.totalorder %s18, 15
      %p152 = scmp.ne.s32.totalorder %s147, %s149
      %p153 = scmp.eq.s32.totalorder %s18, 0
      %p154 = por %p152, %p153
      %p155 = scmp.ne.s32.totalorder %s147, %s149
      %p156 = scmp.eq.s32.totalorder %s23, 15
      %p157 = por %p155, %p156
      %p158 = scmp.ne.s32.totalorder %s149, %s150
      %p159 = scmp.eq.s32.totalorder %s23, 0
      %p160 = por %p158, %p159
      %p161 = scmp.ne.s32.totalorder %s149, %s150
      %p162 = scmp.eq.s32.totalorder %s24, 15
      %p163 = por %p161, %p162
      %p165 = scmp.ne.s32.totalorder %s150, %s164
      %p166 = scmp.eq.s32.totalorder %s24, 0
      %p167 = por %p165, %p166
      %s168 = ssub.s32 %s25, %s37
      %p169 = scmp.eq.s32.totalorder %s168, 0
      %s171 = sadd.s32 %s170, 1
      %s172 = scalar_select %p169, %s170, %s171
      %p175 = pneg %p169
      %p176 = scmp.eq.s32.totalorder %s18, 15
      %p177 = por %p175, %p176
      %p178 = scmp.ne.s32.totalorder %s170, %s173
      %p179 = scmp.eq.s32.totalorder %s18, 0
      %p180 = por %p178, %p179
      %p181 = scmp.ne.s32.totalorder %s170, %s173
      %p182 = scmp.eq.s32.totalorder %s23, 15
      %p183 = por %p181, %p182
      %p184 = scmp.ne.s32.totalorder %s173, %s174
      %p185 = scmp.eq.s32.totalorder %s23, 0
      %p186 = por %p184, %p185
      %p187 = scmp.ne.s32.totalorder %s173, %s174
      %p188 = scmp.eq.s32.totalorder %s24, 15
      %p189 = por %p187, %p188
      %p191 = scmp.ne.s32.totalorder %s174, %s190
      %p192 = scmp.eq.s32.totalorder %s24, 0
      %p193 = por %p191, %p192
      %p194 = scmp.le.s32.totalorder 1, %s18
      %p195 = scmp.lt.s32.totalorder %s18, 17
      %p196 = pnand %p194, %p195
      %p197 = pneg %p196
      // Predicated region
      $region9: #{tpu_custom_call.1} parent=5 // pred_check
        _
      $region10: #{tpu_custom_call.1} parent=5 // pred_check_branch
        %199 = sbr.rel (%p196) target = $region12
      $region11: #{tpu_custom_call.1} parent=5 // pred_region
        %s200 = ssub.s32 %s18, 1
        // Predicated region
        $region13: #{tpu_custom_call.1} parent=11 // pred_check
          %p201 = pneg %p139
        $region14: #{tpu_custom_call.1} parent=11 // pred_check_branch
          %203 = sbr.rel (%p201) target = $region16
        $region15: #{tpu_custom_call.1} parent=11 // pred_region
          %s205 = ssub.s32 1024, 1024
          %206 = vsyncadd [#allocation9], %s205
          %s207 = sshll.u32 [#allocation8], 4
          %s208 = int_to_ptr.vmem [resolvable:$true] %s207
          %213 = dma.hbm_to_vmem [thread:$0]  %s3, 1024, %s208, [#allocation9], 256, 256, 16
        $region16: #{tpu_custom_call.1} parent=11 // pred_fallthru
          _
        // Predicated region
        $region17: #{tpu_custom_call.1} parent=11 // pred_check
          %p214 = pneg %p160
        $region18: #{tpu_custom_call.1} parent=11 // pred_check_branch
          %216 = sbr.rel (%p214) target = $region20
        $region19: #{tpu_custom_call.1} parent=11 // pred_region
          _
        $region20: #{tpu_custom_call.1} parent=11 // pred_fallthru
          _
      $region12: #{tpu_custom_call.1} parent=5 // pred_fallthru
        _
      %p217 = scmp.lt.s32.totalorder %s18, 16
      // Predicated region
      $region21: #{tpu_custom_call.1} parent=5 // pred_check
        %p218 = pneg %p217
      $region22: #{tpu_custom_call.1} parent=5 // pred_check_branch
        %220 = sbr.rel (%p218) target = $region24
      $region23: #{tpu_custom_call.1} parent=5 // pred_region
        // Predicated region
        $region25: #{tpu_custom_call.1} parent=23 // pred_check
          %p221 = pneg %p52
        $region26: #{tpu_custom_call.1} parent=23 // pred_check_branch
          %223 = sbr.rel (%p221) target = $region28
        $region27: #{tpu_custom_call.1} parent=23 // pred_region
          %s224 = sand.u32 %s42, 1
          %s225 = scalar_lea.sflag [#allocation4], %s224
          %s226 = sand.u32 %s42, 1
          %s227 = smul.addr %s226, 4
          %s228 = scalar_lea.vmem [#allocation3], %s227
          %s230 = ssub.s32 64, 64
          %231 = vsyncadd %s225, %s230
          %s232 = smul.addr %s26, 2
          %s233 = smul.addr %s25, 20
          %s234 = sadd.s32 %s232, %s233
          %s235 = smul.addr %s234, 32
          %s236 = scalar_lea.hbm %s0, %s235
          %s238 = sshll.u32 %s228, 4
          %s239 = int_to_ptr.vmem [resolvable:$true] %s238
          %241 = dma.hbm_to_vmem [thread:$0]  %s236, 64, %s239, %s225
        $region28: #{tpu_custom_call.1} parent=23 // pred_fallthru
          _
        // Predicated region
        $region29: #{tpu_custom_call.1} parent=23 // pred_check
          %p242 = pneg %p82
        $region30: #{tpu_custom_call.1} parent=23 // pred_check_branch
          %244 = sbr.rel (%p242) target = $region32
        $region31: #{tpu_custom_call.1} parent=23 // pred_region
          %s245 = sand.u32 %s18, 1
          %s246 = scalar_lea.sflag [#allocation6], %s245
          %s247 = sand.u32 %s72, 1
          %s248 = smul.addr %s247, 4
          %s249 = scalar_lea.vmem [#allocation5], %s248
          %s250 = sadd.s32 %s26, 1
          %s252 = ssub.s32 64, 64
          %253 = vsyncadd %s246, %s252
          %s254 = smul.addr %s250, 2
          %s255 = smul.addr %s25, 20
          %s256 = sadd.s32 %s254, %s255
          %s257 = smul.addr %s256, 32
          %s258 = scalar_lea.hbm %s1, %s257
          %s260 = sshll.u32 %s249, 4
          %s261 = int_to_ptr.vmem [resolvable:$true] %s260
          %263 = dma.hbm_to_vmem [thread:$0]  %s258, 64, %s261, %s246
        $region32: #{tpu_custom_call.1} parent=23 // pred_fallthru
          _
        // Predicated region
        $region33: #{tpu_custom_call.1} parent=23 // pred_check
          %p264 = pneg %p112
        $region34: #{tpu_custom_call.1} parent=23 // pred_check_branch
          %266 = sbr.rel (%p264) target = $region36
        $region35: #{tpu_custom_call.1} parent=23 // pred_region
          %s267 = sand.u32 %s18, 1
          %s268 = scalar_lea.sflag [#allocation6], %s267
          %s269 = sand.u32 %s102, 1
          %s270 = smul.addr %s269, 4
          %s271 = scalar_lea.vmem [#allocation7], %s270
          %s272 = sadd.s32 %s26, 2
          %s274 = ssub.s32 64, 64
          %275 = vsyncadd %s268, %s274
          %s276 = smul.addr %s272, 2
          %s277 = smul.addr %s25, 20
          %s278 = sadd.s32 %s276, %s277
          %s279 = smul.addr %s278, 32
          %s280 = scalar_lea.hbm %s2, %s279
          %s282 = sshll.u32 %s271, 4
          %s283 = int_to_ptr.vmem [resolvable:$true] %s282
          %285 = dma.hbm_to_vmem [thread:$0]  %s280, 64, %s283, %s268
        $region36: #{tpu_custom_call.1} parent=23 // pred_fallthru
          _
      $region24: #{tpu_custom_call.1} parent=5 // pred_fallthru
        _
      %p286 = scmp.le.s32.totalorder 1, %s18
      %p287 = scmp.lt.s32.totalorder %s18, 17
      %p288 = pnand %p286, %p287
      %p289 = pneg %p288
      // Predicated region
      $region37: #{tpu_custom_call.1} parent=5 // pred_check
        _
      $region38: #{tpu_custom_call.1} parent=5 // pred_check_branch
        %291 = sbr.rel (%p288) target = $region40
      $region39: #{tpu_custom_call.1} parent=5 // pred_region
        %s292 = ssub.s32 %s18, 1
        %s293 = sand.u32 %s45, 1
        %s294 = scalar_lea.sflag [#allocation4], %s293
        %s295 = sand.u32 %s45, 1
        %s296 = smul.addr %s295, 4
        %s297 = scalar_lea.vmem [#allocation3], %s296
        // Predicated region
        $region41: #{tpu_custom_call.1} parent=39 // pred_check
          %p298 = pneg %p58
        $region42: #{tpu_custom_call.1} parent=39 // pred_check_branch
          %300 = sbr.rel (%p298) target = $region44
        $region43: #{tpu_custom_call.1} parent=39 // pred_region
          %301 = dma.done %s294, 64
        $region44: #{tpu_custom_call.1} parent=39 // pred_fallthru
          _
        %s302 = sand.u32 %s23, 1
        %s303 = scalar_lea.sflag [#allocation6], %s302
        %s304 = sand.u32 %s75, 1
        %s305 = smul.addr %s304, 4
        %s306 = scalar_lea.vmem [#allocation5], %s305
        // Predicated region
        $region45: #{tpu_custom_call.1} parent=39 // pred_check
          %p307 = pneg %p88
        $region46: #{tpu_custom_call.1} parent=39 // pred_check_branch
          %309 = sbr.rel (%p307) target = $region48
        $region47: #{tpu_custom_call.1} parent=39 // pred_region
          %310 = dma.done %s303, 64
        $region48: #{tpu_custom_call.1} parent=39 // pred_fallthru
          _
        %s311 = sand.u32 %s23, 1
        %s312 = scalar_lea.sflag [#allocation6], %s311
        %s313 = sand.u32 %s105, 1
        %s314 = smul.addr %s313, 4
        %s315 = scalar_lea.vmem [#allocation7], %s314
        // Predicated region
        $region49: #{tpu_custom_call.1} parent=39 // pred_check
          %p316 = pneg %p118
        $region50: #{tpu_custom_call.1} parent=39 // pred_check_branch
          %318 = sbr.rel (%p316) target = $region52
        $region51: #{tpu_custom_call.1} parent=39 // pred_region
          %319 = dma.done %s312, 64
        $region52: #{tpu_custom_call.1} parent=39 // pred_fallthru
          _
        // Predicated region
        $region53: #{tpu_custom_call.1} parent=39 // pred_check
          %p320 = pneg %p139
        $region54: #{tpu_custom_call.1} parent=39 // pred_check_branch
          %322 = sbr.rel (%p320) target = $region56
        $region55: #{tpu_custom_call.1} parent=39 // pred_region
          %323 = dma.done [#allocation9], 1024
        $region56: #{tpu_custom_call.1} parent=39 // pred_fallthru
          _
        %s324 = sand.u32 %s45, 1
        %s325 = scalar_lea.sflag [#allocation4], %s324
        %s326 = sand.u32 %s45, 1
        %s327 = smul.addr %s326, 4
        %s328 = scalar_lea.vmem [#allocation3], %s327
        %p329 = pneg %p58
        %p330 = pneg %p55
        %s331 = sand.u32 %s23, 1
        %s332 = scalar_lea.sflag [#allocation6], %s331
        %s333 = sand.u32 %s75, 1
        %s334 = smul.addr %s333, 4
        %s335 = scalar_lea.vmem [#allocation5], %s334
        %p336 = pneg %p88
        %p337 = pneg %p85
        %s338 = sand.u32 %s23, 1
        %s339 = scalar_lea.sflag [#allocation6], %s338
        %s340 = sand.u32 %s105, 1
        %s341 = smul.addr %s340, 4
        %s342 = scalar_lea.vmem [#allocation7], %s341
        %p343 = pneg %p118
        %p344 = pneg %p115
        %p345 = pneg %p139
        %p346 = pneg %p136
        %p347 = pneg %p160
        %p348 = pneg %p157
        %p349 = pneg %p186
        %p350 = pneg %p183
        %p351 = scmp.lt.s32.totalorder %s27, 1
        %s352 = scalar_select %p351, %s27, 1
        %s353 = smul.addr %s352, 4
        %s354 = smul.addr %s353, 8
        %s355 = scalar_lea.vmem %s5, %s354
        %s356 = sadd.s32 %s28, 1
        %s357 = sadd.s32 %s28, 2
        %p358 = scmp.lt.s32.totalorder %s27, 1
        %s359 = scalar_select %p358, %s27, 1
        %s360 = smul.addr %s359, 4
        %s361 = smul.addr %s360, 8
        %s362 = scalar_lea.vmem %s5, %s361
        %364 = vst [vmem:[#allocation2] sm:$0xff] 0
        %365 = vst [vmem:[#allocation2 + $0x8] sm:$0xff] 0
        %366 = vst [vmem:[#allocation2 + $0x10] sm:$0xff] 0
        %367 = vst [vmem:[#allocation2 + $0x18] sm:$0xff] 0
        %368 = vst [vmem:[#allocation2 + $0x20] sm:$0xff] 0
        %369 = vst [vmem:[#allocation2 + $0x28] sm:$0xff] 0
        %v370 = vld [vmem:[%s297] sm:$0xf]
        %v373 = vunpack.c.l.s4 1983009808
        %v374 = vunpack.c.0.s8 %v373
        %v375 = vlaneseq
        %v376 = vshrl.u32 %v375, 7
        %v377 = vsub.s32 %v374, %v376
        %v378 = vrot.slane %v370, %v377
        %v379 = vcombine.high %v378, %v378
        %382 = vst [vmem:[#allocation2] sm:$0x3] %v378
        %383 = vst [vmem:[#allocation2 + $0x8] sm:$0x3] %v379
        %v384 = vld [vmem:[%s306] sm:$0xf]
        %v387 = vunpack.c.l.s4 1983009808
        %v388 = vunpack.c.0.s8 %v387
        %v389 = vlaneseq
        %v390 = vshrl.u32 %v389, 7
        %v391 = vsub.s32 %v388, %v390
        %v392 = vrot.slane %v384, %v391
        %v393 = vcombine.high %v392, %v392
        %s396 = scalar_lea.vmem [#allocation2], 16
        %397 = vst [vmem:[%s396] sm:$0x3] %v392
        %398 = vst [vmem:[%s396 + $0x8] sm:$0x3] %v393
        %v399 = vld [vmem:[%s315] sm:$0xf]
        %v402 = vunpack.c.l.s4 1983009808
        %v403 = vunpack.c.0.s8 %v402
        %v404 = vlaneseq
        %v405 = vshrl.u32 %v404, 7
        %v406 = vsub.s32 %v403, %v405
        %v407 = vrot.slane %v399, %v406
        %v408 = vcombine.high %v407, %v407
        %s411 = scalar_lea.vmem [#allocation2], 32
        %412 = vst [vmem:[%s411] sm:$0x3] %v407
        %413 = vst [vmem:[%s411 + $0x8] sm:$0x3] %v408
        %v414 = vld [vmem:[#allocation2] sm:$0xff]
        %v415 = vld [vmem:[#allocation2 + $0x8] sm:$0xff]
        %v416 = vld [vmem:[%s396] sm:$0xff]
        %v417 = vld [vmem:[%s396 + $0x8] sm:$0xff]
        %v418 = vld [vmem:[%s411] sm:$0xff]
        %v419 = vld [vmem:[%s411 + $0x8] sm:$0xff]
        %422 = vrot.lane.b32.xlu0 %v414, 127
        %v423 = vpop.permute.xlu0 %422
        %424 = vrot.lane.b32.xlu0 %v415, 127
        %v425 = vpop.permute.xlu0 %424
        %vm426 = vcmask 1039360
        %v427 = vsel %vm426, %v423, %v425
        %429 = vrot.lane.b32.xlu0 %v414, 126
        %v430 = vpop.permute.xlu0 %429
        %431 = vrot.lane.b32.xlu0 %v415, 126
        %v432 = vpop.permute.xlu0 %431
        %vm433 = vcmask 1031168
        %v434 = vsel %vm433, %v430, %v432
        %436 = vrot.lane.b32.xlu0 %v414, 118
        %v437 = vpop.permute.xlu0 %436
        %438 = vrot.lane.b32.xlu0 %v415, 118
        %v439 = vpop.permute.xlu0 %438
        %vm440 = vcmask 965632
        %v441 = vsel %vm440, %v437, %v439
        %443 = vrot.lane.b32.xlu0 %v414, 117
        %v444 = vpop.permute.xlu0 %443
        %445 = vrot.lane.b32.xlu0 %v415, 117
        %v446 = vpop.permute.xlu0 %445
        %vm447 = vcmask 957440
        %v448 = vsel %vm447, %v444, %v446
        %450 = vrot.lane.b32.xlu0 %v414, 116
        %v451 = vpop.permute.xlu0 %450
        %452 = vrot.lane.b32.xlu0 %v415, 116
        %v453 = vpop.permute.xlu0 %452
        %vm454 = vcmask 949248
        %v455 = vsel %vm454, %v451, %v453
        %457 = vrot.lane.b32.xlu0 %v414, 108
        %v458 = vpop.permute.xlu0 %457
        %459 = vrot.lane.b32.xlu0 %v415, 108
        %v460 = vpop.permute.xlu0 %459
        %vm461 = vcmask 883712
        %v462 = vsel %vm461, %v458, %v460
        %464 = vrot.lane.b32.xlu0 %v414, 107
        %v465 = vpop.permute.xlu0 %464
        %466 = vrot.lane.b32.xlu0 %v415, 107
        %v467 = vpop.permute.xlu0 %466
        %vm468 = vcmask 875520
        %v469 = vsel %vm468, %v465, %v467
        %471 = vrot.lane.b32.xlu0 %v414, 106
        %v472 = vpop.permute.xlu0 %471
        %473 = vrot.lane.b32.xlu0 %v415, 106
        %v474 = vpop.permute.xlu0 %473
        %vm475 = vcmask 867328
        %v476 = vsel %vm475, %v472, %v474
        %480 = vrot.lane.b32.xlu0 %v416, 127
        %v481 = vpop.permute.xlu0 %480
        %482 = vrot.lane.b32.xlu0 %v417, 127
        %v483 = vpop.permute.xlu0 %482
        %v484 = vsel %vm426, %v481, %v483
        %486 = vrot.lane.b32.xlu0 %v416, 126
        %v487 = vpop.permute.xlu0 %486
        %488 = vrot.lane.b32.xlu0 %v417, 126
        %v489 = vpop.permute.xlu0 %488
        %v490 = vsel %vm433, %v487, %v489
        %492 = vrot.lane.b32.xlu0 %v416, 118
        %v493 = vpop.permute.xlu0 %492
        %494 = vrot.lane.b32.xlu0 %v417, 118
        %v495 = vpop.permute.xlu0 %494
        %v496 = vsel %vm440, %v493, %v495
        %498 = vrot.lane.b32.xlu0 %v416, 117
        %v499 = vpop.permute.xlu0 %498
        %500 = vrot.lane.b32.xlu0 %v417, 117
        %v501 = vpop.permute.xlu0 %500
        %v502 = vsel %vm447, %v499, %v501
        %504 = vrot.lane.b32.xlu0 %v416, 116
        %v505 = vpop.permute.xlu0 %504
        %506 = vrot.lane.b32.xlu0 %v417, 116
        %v507 = vpop.permute.xlu0 %506
        %v508 = vsel %vm454, %v505, %v507
        %510 = vrot.lane.b32.xlu0 %v416, 108
        %v511 = vpop.permute.xlu0 %510
        %512 = vrot.lane.b32.xlu0 %v417, 108
        %v513 = vpop.permute.xlu0 %512
        %v514 = vsel %vm461, %v511, %v513
        %517 = vrot.lane.b32.xlu0 %v418, 21
        %v518 = vpop.permute.xlu0 %517
        %520 = vrot.lane.b32.xlu0 %v418, 20
        %v521 = vpop.permute.xlu0 %520
        %522 = vrot.lane.b32.xlu0 %v419, 20
        %v523 = vpop.permute.xlu0 %522
        %vm524 = vcmask 162816
        %v525 = vsel %vm524, %v521, %v523
        %526 = vrot.lane.b32.xlu0 %v418, 19
        %v527 = vpop.permute.xlu0 %526
        %528 = vrot.lane.b32.xlu0 %v419, 19
        %v529 = vpop.permute.xlu0 %528
        %vm530 = vcmask 154624
        %v531 = vsel %vm530, %v527, %v529
        %532 = vrot.lane.b32.xlu0 %v418, 11
        %v533 = vpop.permute.xlu0 %532
        %534 = vrot.lane.b32.xlu0 %v419, 11
        %v535 = vpop.permute.xlu0 %534
        %vm536 = vcmask 89088
        %v537 = vsel %vm536, %v533, %v535
        %538 = vrot.lane.b32.xlu0 %v418, 10
        %v539 = vpop.permute.xlu0 %538
        %540 = vrot.lane.b32.xlu0 %v419, 10
        %v541 = vpop.permute.xlu0 %540
        %vm542 = vcmask 80896
        %v543 = vsel %vm542, %v539, %v541
        %544 = vrot.lane.b32.xlu0 %v418, 9
        %v545 = vpop.permute.xlu0 %544
        %546 = vrot.lane.b32.xlu0 %v419, 9
        %v547 = vpop.permute.xlu0 %546
        %vm548 = vcmask 72704
        %v549 = vsel %vm548, %v545, %v547
        %550 = vrot.lane.b32.xlu0 %v418, 1
        %v551 = vpop.permute.xlu0 %550
        %552 = vrot.lane.b32.xlu0 %v419, 1
        %v553 = vpop.permute.xlu0 %552
        %vm554 = vcmask 7168
        %v555 = vsel %vm554, %v551, %v553
        %556 = vrot.lane.b32.xlu0 %v418, 127
        %v557 = vpop.permute.xlu0 %556
        %558 = vrot.lane.b32.xlu0 %v419, 127
        %v559 = vpop.permute.xlu0 %558
        %v560 = vsel %vm426, %v557, %v559
        %561 = vrot.lane.b32.xlu0 %v416, 107
        %v562 = vpop.permute.xlu0 %561
        %563 = vrot.lane.b32.xlu0 %v417, 107
        %v564 = vpop.permute.xlu0 %563
        %565 = vrot.lane.b32.xlu0 %v484, 107
        %v566 = vpop.permute.xlu0 %565
        %567 = vrot.lane.b32.xlu0 %v483, 107
        %v568 = vpop.permute.xlu0 %567
        %569 = vrot.lane.b32.xlu0 %v518, 107
        %v570 = vpop.permute.xlu0 %569
        %571 = vrot.lane.b32.xlu0 %v521, 107
        %v572 = vpop.permute.xlu0 %571
        %573 = vrot.lane.b32.xlu0 %v525, 107
        %v574 = vpop.permute.xlu0 %573
        %575 = vrot.lane.b32.xlu0 %v527, 107
        %v576 = vpop.permute.xlu0 %575
        %577 = vrot.lane.b32.xlu0 %v531, 107
        %v578 = vpop.permute.xlu0 %577
        %579 = vrot.lane.b32.xlu0 %v533, 107
        %v580 = vpop.permute.xlu0 %579
        %581 = vrot.lane.b32.xlu0 %v537, 107
        %v582 = vpop.permute.xlu0 %581
        %583 = vrot.lane.b32.xlu0 %v539, 107
        %v584 = vpop.permute.xlu0 %583
        %585 = vrot.lane.b32.xlu0 %v543, 107
        %v586 = vpop.permute.xlu0 %585
        %587 = vrot.lane.b32.xlu0 %v545, 107
        %v588 = vpop.permute.xlu0 %587
        %589 = vrot.lane.b32.xlu0 %v549, 107
        %v590 = vpop.permute.xlu0 %589
        %591 = vrot.lane.b32.xlu0 %v551, 107
        %v592 = vpop.permute.xlu0 %591
        %593 = vrot.lane.b32.xlu0 %v555, 107
        %v594 = vpop.permute.xlu0 %593
        %595 = vrot.lane.b32.xlu0 %v418, 107
        %v596 = vpop.permute.xlu0 %595
        %597 = vrot.lane.b32.xlu0 %v419, 107
        %v598 = vpop.permute.xlu0 %597
        %599 = vrot.lane.b32.xlu0 %v560, 107
        %v600 = vpop.permute.xlu0 %599
        %601 = vrot.lane.b32.xlu0 %v559, 107
        %v602 = vpop.permute.xlu0 %601
        %v603 = vsel %vm468, %v562, %v564
        %v604 = vsel %vm468, %v566, %v568
        %v605 = vsel %vm468, %v572, %v574
        %v606 = vsel %vm468, %v576, %v578
        %v607 = vsel %vm468, %v580, %v582
        %v608 = vsel %vm468, %v584, %v586
        %v609 = vsel %vm468, %v588, %v590
        %v610 = vsel %vm468, %v592, %v594
        %v611 = vsel %vm468, %v596, %v598
        %v612 = vsel %vm468, %v600, %v602
        %v624 = vld [vmem:[#allocation8] sm:$0xff]
        %v625 = vld [vmem:[#allocation8 + $0x8] sm:$0xff]
        %v626 = vld [vmem:[#allocation8 + $0x10] sm:$0xff]
        %v627 = vld [vmem:[#allocation8 + $0x18] sm:$0xff]
        %v628 = vld [vmem:[#allocation8 + $0x20] sm:$0xff]
        %v629 = vld [vmem:[#allocation8 + $0x28] sm:$0xff]
        %v630 = vld [vmem:[#allocation8 + $0x30] sm:$0xff]
        %v631 = vld [vmem:[#allocation8 + $0x38] sm:$0xff]
        %v640 = vunpack.c.l.b16 %v624
        %v641 = vunpack.c.h.b16 %v624
        %v642 = vunpack.c.l.b16 %v625
        %v643 = vunpack.c.h.b16 %v625
        %v644 = vunpack.c.l.b16 %v626
        %v645 = vunpack.c.h.b16 %v626
        %v646 = vunpack.c.l.b16 %v627
        %v647 = vunpack.c.h.b16 %v627
        %v648 = vunpack.c.l.b16 %v628
        %v649 = vunpack.c.h.b16 %v628
        %v650 = vunpack.c.l.b16 %v629
        %v651 = vunpack.c.h.b16 %v629
        %v652 = vunpack.c.l.b16 %v630
        %v653 = vunpack.c.h.b16 %v630
        %v654 = vunpack.c.l.b16 %v631
        %v655 = vunpack.c.h.b16 %v631
        %v656 = vpack.c.b16 %v644, %v640
        %v657 = vpack.c.b16 %v645, %v641
        %v658 = vpack.c.b16 %v646, %v642
        %v659 = vpack.c.b16 %v647, %v643
        %v660 = vpack.c.b16 %v652, %v648
        %v661 = vpack.c.b16 %v653, %v649
        %v662 = vpack.c.b16 %v654, %v650
        %v663 = vpack.c.b16 %v655, %v651
        %vm670 = vcmask 392192
        %v672 = vsel %vm670, %v659, 0
        %v675 = vsel %vm670, %v663, 0
        %677 = vmatprep.subr.bf16.mxu0 0
        %678 = vmatpush1.bf16.msra.mxu0 %v414
        %679 = vmatprep.subr.bf16.mxu0 0
        %680 = vmatpush1.bf16.msra.mxu0 %v427
        %681 = vmatprep.subr.bf16.mxu0 0
        %682 = vmatpush1.bf16.msra.mxu0 %v434
        %683 = vmatprep.subr.bf16.mxu0 0
        %684 = vmatpush1.bf16.msra.mxu0 %v441
        %685 = vmatprep.subr.bf16.mxu0 0
        %686 = vmatpush1.bf16.msra.mxu0 %v448
        %687 = vmatprep.subr.bf16.mxu0 0
        %688 = vmatpush1.bf16.msra.mxu0 %v455
        %689 = vmatprep.subr.bf16.mxu0 0
        %690 = vmatpush1.bf16.msra.mxu0 %v462
        %691 = vmatprep.subr.bf16.mxu0 0
        %692 = vmatpush1.bf16.msra.mxu0 %v469
        %693 = vmatprep.subr.bf16.mxu0 0
        %694 = vmatpush1.bf16.msra.mxu0 %v476
        %695 = vmatprep.subr.bf16.mxu0 0
        %696 = vmatpush1.bf16.msra.mxu0 %v416
        %697 = vmatprep.subr.bf16.mxu0 0
        %698 = vmatpush1.bf16.msra.mxu0 %v484
        %699 = vmatprep.subr.bf16.mxu0 0
        %700 = vmatpush1.bf16.msra.mxu0 %v490
        %701 = vmatprep.subr.bf16.mxu0 0
        %702 = vmatpush1.bf16.msra.mxu0 %v496
        %703 = vmatprep.subr.bf16.mxu0 0
        %704 = vmatpush1.bf16.msra.mxu0 %v502
        %705 = vmatprep.subr.bf16.mxu0 0
        %706 = vmatpush1.bf16.msra.mxu0 %v508
        %707 = vmatprep.subr.bf16.mxu0 0
        %708 = vmatpush1.bf16.msra.mxu0 %v514
        %709 = vmatprep.mubr.bf16.mxu0 %v657
        %710 = vmatmul.mubr.bf16.gmra.mrb[0].mxu0 %v656
        %v711 = vpop.f32.mrb[0].mxu0
        %v712 = vadd.f32 0.0, %v711
        %v713 = vpop.f32.mrb[0].mxu0
        %v714 = vpop.f32.mrb[0].mxu0
        %v715 = vadd.f32 0.0, %v714
        %v716 = vpop.f32.mrb[0].mxu0
        %717 = vmatprep.mubr.bf16.mxu0 %v661
        %718 = vmatmul.mubr.bf16.gmra.mrb[0].mxu0 %v660
        %v719 = vpop.f32.mrb[0].mxu0
        %v720 = vadd.f32 0.0, %v719
        %v721 = vpop.f32.mrb[0].mxu0
        %v722 = vpop.f32.mrb[0].mxu0
        %v723 = vadd.f32 0.0, %v722
        %v724 = vpop.f32.mrb[0].mxu0
        %725 = vdwg.mxu0
        %726 = vmatprep.subr.bf16.mxu0 0
        %727 = vmatpush1.bf16.msra.mxu0 %v603
        %728 = vmatprep.subr.bf16.mxu0 0
        %729 = vmatpush1.bf16.msra.mxu0 %v604
        %730 = vmatprep.subr.bf16.mxu0 0
        %731 = vmatpush1.bf16.msra.mxu0 %v570
        %732 = vmatprep.subr.bf16.mxu0 0
        %733 = vmatpush1.bf16.msra.mxu0 %v605
        %734 = vmatprep.subr.bf16.mxu0 0
        %735 = vmatpush1.bf16.msra.mxu0 %v606
        %736 = vmatprep.subr.bf16.mxu0 0
        %737 = vmatpush1.bf16.msra.mxu0 %v607
        %738 = vmatprep.subr.bf16.mxu0 0
        %739 = vmatpush1.bf16.msra.mxu0 %v608
        %740 = vmatprep.subr.bf16.mxu0 0
        %741 = vmatpush1.bf16.msra.mxu0 %v609
        %742 = vmatprep.subr.bf16.mxu0 0
        %743 = vmatpush1.bf16.msra.mxu0 %v610
        %744 = vmatprep.subr.bf16.mxu0 0
        %745 = vmatpush1.bf16.msra.mxu0 %v611
        %746 = vmatprep.subr.bf16.mxu0 0
        %747 = vmatpush1.bf16.msra.mxu0 %v612
        %748 = vmatprep.subr.bf16.mxu0 0
        %749 = vmatpush1.bf16.msra.mxu0 0
        %750 = vmatprep.subr.bf16.mxu0 0
        %751 = vmatpush1.bf16.msra.mxu0 0
        %752 = vmatprep.subr.bf16.mxu0 0
        %753 = vmatpush1.bf16.msra.mxu0 0
        %754 = vmatprep.subr.bf16.mxu0 0
        %755 = vmatpush1.bf16.msra.mxu0 0
        %756 = vmatprep.subr.bf16.mxu0 0
        %757 = vmatpush1.bf16.msra.mxu0 0
        %758 = vmatprep.mubr.bf16.mxu0 %v672
        %759 = vmatmul.mubr.bf16.gmra.mrb[0].mxu0 %v658
        %v760 = vpop.f32.mrb[0].mxu0
        %v761 = vadd.f32 %v712, %v760
        %v762 = vpop.f32.mrb[0].mxu0
        %v763 = vpop.f32.mrb[0].mxu0
        %v764 = vadd.f32 %v715, %v763
        %v765 = vpop.f32.mrb[0].mxu0
        %766 = vmatprep.mubr.bf16.mxu0 %v675
        %767 = vmatmul.mubr.bf16.gmra.mrb[0].mxu0 %v662
        %v768 = vpop.f32.mrb[0].mxu0
        %v769 = vadd.f32 %v720, %v768
        %v770 = vpop.f32.mrb[0].mxu0
        %v771 = vpop.f32.mrb[0].mxu0
        %v772 = vadd.f32 %v723, %v771
        %v773 = vpop.f32.mrb[0].mxu0
        %774 = vdwg.mxu0
        %v775 = vld [vmem:[%s4] sm:$0x1]
        %v777 = vlaneseq
        %v778 = vshrl.u32 %v777, 7
        %v779 = vsub.s32 0, %v778
        %v780 = vrot.slane %v775, %v779
        %v782 = vmul.f32 %v761, %v780
        %v783 = vmul.f32 %v764, %v780
        %v784 = vmul.f32 %v769, %v780
        %v785 = vmul.f32 %v772, %v780
        %786 = vadd.xlane.f32.xlu0 %v782
        %v787 = vpop.xlane.xlu0 %786
        %788 = vadd.xlane.f32.xlu0 %v783
        %v789 = vpop.xlane.xlu0 %788
        %790 = vadd.xlane.f32.xlu0 %v784
        %v791 = vpop.xlane.xlu0 %790
        %792 = vadd.xlane.f32.xlu0 %v785
        %v793 = vpop.xlane.xlu0 %792
        %v794 = vmul.f32 %v782, %v782
        %v795 = vmul.f32 %v783, %v783
        %v796 = vmul.f32 %v784, %v784
        %v797 = vmul.f32 %v785, %v785
        %798 = vadd.xlane.f32.xlu0 %v794
        %v799 = vpop.xlane.xlu0 %798
        %800 = vadd.xlane.f32.xlu0 %v795
        %v801 = vpop.xlane.xlu0 %800
        %802 = vadd.xlane.f32.xlu0 %v796
        %v803 = vpop.xlane.xlu0 %802
        %804 = vadd.xlane.f32.xlu0 %v797
        %v805 = vpop.xlane.xlu0 %804
        %p806 = scmp.eq.s32.totalorder %s28, 0
        // Predicated region
        $region57: #{tpu_custom_call.1} parent=39 // pred_check
          %p807 = pneg %p806
        $region58: #{tpu_custom_call.1} parent=39 // pred_check_branch
          %809 = sbr.rel (%p807) target = $region60
        $region59: #{tpu_custom_call.1} parent=39 // pred_region
          %vm810 = vcmask 15360
          %811 = vst.msk [vmem:[%s362] sm:$0xff] %vm810, 0.0
          %812 = vst.msk [vmem:[%s362 + $0x8] sm:$0xff] %vm810, 0.0
          %813 = vst.msk [vmem:[%s362 + $0x10] sm:$0xff] %vm810, 0.0
          %814 = vst.msk [vmem:[%s362 + $0x18] sm:$0xff] %vm810, 0.0
        $region60: #{tpu_custom_call.1} parent=39 // pred_fallthru
          _
        %v815 = vld [vmem:[%s362] sm:$0xff]
        %v816 = vld [vmem:[%s362 + $0x8] sm:$0xff]
        %v817 = vld [vmem:[%s362 + $0x10] sm:$0xff]
        %v818 = vld [vmem:[%s362 + $0x18] sm:$0xff]
        %v819 = vadd.f32 %v815, %v787
        %v820 = vadd.f32 %v816, %v789
        %v821 = vadd.f32 %v817, %v791
        %v822 = vadd.f32 %v818, %v793
        %vm823 = vcmask 7168
        %824 = vst.msk [vmem:[%s362] sm:$0xff] %vm823, %v819
        %825 = vst.msk [vmem:[%s362 + $0x8] sm:$0xff] %vm823, %v820
        %826 = vst.msk [vmem:[%s362 + $0x10] sm:$0xff] %vm823, %v821
        %827 = vst.msk [vmem:[%s362 + $0x18] sm:$0xff] %vm823, %v822
        %v828 = vld [vmem:[%s362] sm:$0xff]
        %v829 = vld [vmem:[%s362 + $0x8] sm:$0xff]
        %v830 = vld [vmem:[%s362 + $0x10] sm:$0xff]
        %v831 = vld [vmem:[%s362 + $0x18] sm:$0xff]
        %v832 = vadd.f32 %v828, %v799
        %v833 = vadd.f32 %v829, %v801
        %v834 = vadd.f32 %v830, %v803
        %v835 = vadd.f32 %v831, %v805
        %vm836 = vcmask 15368
        %837 = vst.msk [vmem:[%s362] sm:$0xff] %vm836, %v832
        %838 = vst.msk [vmem:[%s362 + $0x8] sm:$0xff] %vm836, %v833
        %839 = vst.msk [vmem:[%s362 + $0x10] sm:$0xff] %vm836, %v834
        %840 = vst.msk [vmem:[%s362 + $0x18] sm:$0xff] %vm836, %v835
        %p841 = scmp.lt.s32.totalorder %s27, 1
        %s842 = scalar_select %p841, %s27, 1
        %s843 = smul.addr %s842, 4
        %s844 = smul.addr %s843, 8
        %s845 = scalar_lea.vmem %s5, %s844
        // Predicated region
        $region61: #{tpu_custom_call.1} parent=39 // pred_check
          %p846 = pneg %p183
        $region62: #{tpu_custom_call.1} parent=39 // pred_check_branch
          %848 = sbr.rel (%p846) target = $region64
        $region63: #{tpu_custom_call.1} parent=39 // pred_region
          _
        $region64: #{tpu_custom_call.1} parent=39 // pred_fallthru
          _
      $region40: #{tpu_custom_call.1} parent=5 // pred_fallthru
        _
      %p849 = scmp.le.s32.totalorder 2, %s18
      // Predicated region
      $region65: #{tpu_custom_call.1} parent=5 // pred_check
        %p850 = pneg %p849
      $region66: #{tpu_custom_call.1} parent=5 // pred_check_branch
        %852 = sbr.rel (%p850) target = $region68
      $region67: #{tpu_custom_call.1} parent=5 // pred_region
        %s853 = ssub.s32 %s18, 2
        // Predicated region
        $region69: #{tpu_custom_call.1} parent=67 // pred_check
          %p854 = pneg %p189
        $region70: #{tpu_custom_call.1} parent=67 // pred_check_branch
          %856 = sbr.rel (%p854) target = $region72
        $region71: #{tpu_custom_call.1} parent=67 // pred_region
          %p857 = scmp.lt.s32.totalorder %s29, 1
          %s858 = scalar_select %p857, %s29, 1
          %s859 = smul.addr %s858, 4
          %s860 = smul.addr %s859, 8
          %s861 = scalar_lea.vmem %s5, %s860
        $region72: #{tpu_custom_call.1} parent=67 // pred_fallthru
          _
      $region68: #{tpu_custom_call.1} parent=5 // pred_fallthru
        _
    $region6: #{tpu_custom_call.1} parent=1 // loop_footer
      %s22 = sadd.s32 1, %s18
    $region7: #{tpu_custom_call.1} parent=1 // loop_footer_branch
      %17 = sbr.rel target = $region3
    $region8: #{tpu_custom_call.1} parent=1 // loop_exit
      _
    %862 = vsyncpa [#allocation4], 1
    %s863 = scalar_lea.sflag [#allocation4], 1
    %864 = vsyncpa %s863, 1
    %865 = vsyncpa [#allocation6], 1
    %s866 = scalar_lea.sflag [#allocation6], 1
    %867 = vsyncpa %s866, 1
    %868 = vsyncpa [#allocation9], 1

</llo_original>
